<compile_context>
chip_gen: v6e
topology: v6e:2x2x1
jax: 0.10.0
libtpu: 0.0.40
codegen_flags: <defaults>
</compile_context>

<pallas_src>
import jax
import jax.numpy as jnp
from jax import lax
from jax.experimental import pallas as pl
from jax.experimental.pallas import tpu as pltpu

_WEIGHTS = (1.0, 0.5, 0.25, 0.125, 0.125)


# ---------------- in-kernel pool-matrix helpers ----------------
def _pool_mat(h_out, h_in):
    """(h_out, h_in) f32 with 0.5 at [o, 2o] and [o, 2o+1] (sublane avg-pool)."""
    rows = lax.broadcasted_iota(jnp.int32, (h_out, h_in), 0)
    cols = lax.broadcasted_iota(jnp.int32, (h_out, h_in), 1)
    hit = (cols == 2 * rows) | (cols == 2 * rows + 1)
    return jnp.where(hit, jnp.float32(0.5), jnp.float32(0.0))


def _pool_mat_t(w_in, w_out):
    """(w_in, w_out) f32 with 0.5 at [2o, o] and [2o+1, o] (lane avg-pool)."""
    rows = lax.broadcasted_iota(jnp.int32, (w_in, w_out), 0)
    cols = lax.broadcasted_iota(jnp.int32, (w_in, w_out), 1)
    hit = (rows == 2 * cols) | (rows == 2 * cols + 1)
    return jnp.where(hit, jnp.float32(0.5), jnp.float32(0.0))


# ---------------- kernel ----------------
def _make_kernel(n_scales, tile_dims, consts, has_mask):
    """tile_dims[i] = (h_i, w_i) of the per-tile plane at scale i; consts[i] =
    weight_i / (N*C*GH_i*GW_i) with GLOBAL pooled dims, folded at trace time."""

    def kernel(*refs):
        out_ref = refs[-1]
        x = refs[0][0, 0].astype(jnp.float32)                       # (th, W)
        y = refs[1][0, 0].astype(jnp.float32)                       # (th, W)
        d = x - y          # pooling is linear: pool(x) - pool(y) == pool(x - y)
        m = refs[2][0, 0].astype(jnp.float32) if has_mask else None  # (th, W)

        acc = jnp.float32(0.0)
        for i in range(n_scales):                                   # static unroll
            # |x*m - y*m| == |m * (x - y)| exactly, for any mask.
            diff = jnp.abs(d * m) if has_mask else jnp.abs(d)
            # TODO(synk): fold the per-scale scalar reduce into one persistent
            # lane-shaped accumulator (ragged per-scale shapes make this fiddly;
            # XLU savings are small).
            acc = acc + jnp.sum(diff) * jnp.float32(consts[i])
            if i != n_scales - 1:
                hi, wi = tile_dims[i]
                # Pool matrices are regenerated per step on purpose: caching them
                # in scratch under `program_id(...) == 0` is unsafe when a grid
                # axis is megacore-sharded, and generating them costs <1% of the
                # pooling matmuls themselves.
                pwt = _pool_mat_t(wi, wi // 2)                      # (wi, wi//2)
                ph = _pool_mat(hi // 2, hi)                         # (hi//2, hi)
                # TODO(synk): on v5e at very large W, run these pool matmuls in
                # bf16 (or a roll/add lane path) to stay HBM-bound; kept f32 here
                # to preserve exact parity with the reference.
                d = jnp.dot(ph, jnp.dot(d, pwt, preferred_element_type=jnp.float32),
                            preferred_element_type=jnp.float32)
                if has_mask:
                    m = jnp.dot(ph, jnp.dot(m, pwt, preferred_element_type=jnp.float32),
                                preferred_element_type=jnp.float32)

        out_ref[...] = jnp.full((1, 1, 1), acc, dtype=jnp.float32)

    return kernel


# ---------------- wrapper ----------------
def multiscale_l1_loss(inp, target, mask=None, scale=5):
    """Pallas TPU MultiscaleL1Loss.forward. inp/target: (N,C,H,W); mask: (N,1,H,W)."""
    weights = list(_WEIGHTS[:scale])
    n, c, h, w = inp.shape
    has_mask = mask is not None
    m_planes = 1 if has_mask else 0
    itemsize = jnp.dtype(inp.dtype).itemsize

    # Clamp the effective number of scales so no pooled dim reaches 0 (PyTorch's
    # AvgPool2d would raise there); a no-op for in-spec inputs.
    n_scales = 1
    hh, ww = h, w
    while n_scales < len(weights) and hh >= 2 and ww >= 2:
        hh //= 2
        ww //= 2
        n_scales += 1
    weights = weights[:n_scales]

    # ---- H tiling (only when the full-plane working set is large) ----
    align = max(2 ** (n_scales - 1), 8)          # keep every pool window intact
    bytes_per_row = w * ((2 + m_planes) * itemsize * 2 + (1 + m_planes) * 4 * 2)
    tile_h = h
    if h * bytes_per_row > (8 << 20) and h % align == 0:
        budget_rows = max(align, (8 << 20) // bytes_per_row)
        best, t = h, align
        while t <= min(h, budget_rows):
            if h % t == 0:
                best = t
            t += align
        tile_h = best if best <= budget_rows else h
        # TODO(synk): if H has no suitable divisor we fall back to full-H blocks,
        # which may exceed VMEM for extreme resolutions on v7x.
    n_th = h // tile_h

    # Per-scale global dims (mean denominators) and per-tile dims (pool shapes).
    # When n_th > 1, tile_h (hence H) is divisible by 2^(n_scales-1), so the
    # per-tile pooled rows sum exactly to the global pooled rows.
    gdims, tdims = [], []
    gh, gw, th = h, w, tile_h
    for _ in range(n_scales):
        gdims.append((gh, gw))
        tdims.append((th, gw))
        gh, gw, th = gh // 2, gw // 2, th // 2
    consts = [weights[i] / float(n * c * gdims[i][0] * gdims[i][1])
              for i in range(n_scales)]

    # ---- specs ----
    args = [inp, target]
    # TODO(synk): on v6e, if xprof shows exposed DMA, add
    # pipeline_mode=pl.Buffered(3) to the inp/target specs (keep depth 2 on v7x).
    in_specs = [
        pl.BlockSpec((1, 1, tile_h, w), lambda b, t, ch: (b, ch, t, 0)),
        pl.BlockSpec((1, 1, tile_h, w), lambda b, t, ch: (b, ch, t, 0)),
    ]
    if has_mask:
        args.append(mask)
        # Channel index ignored -> block index unchanged across the innermost
        # channel axis, so Pallas skips re-DMAing the mask block.
        in_specs.append(pl.BlockSpec((1, 1, tile_h, w), lambda b, t, ch: (b, 0, t, 0)))

    n_steps = n * n_th * c
    out_spec = pl.BlockSpec((1, 1, 1),
                            lambda b, t, ch: ((b * n_th + t) * c + ch, 0, 0))

    # ---- VMEM budget (no double-counting; per-generation cap) ----
    blk_bytes = (2 + m_planes) * tile_h * w * itemsize * 2   # double-buffered inputs
    work_bytes = (1 + m_planes) * tile_h * w * 4 * 2         # f32 diff/mask + pyramid
    poolmat_bytes = (w * (w // 2) + (tile_h // 2) * tile_h) * 4
    est = blk_bytes + work_bytes + poolmat_bytes + (4 << 20)
    try:
        vmem_cap = int(pltpu.get_tpu_info().vmem_capacity_bytes)
    except Exception:
        vmem_cap = 64 << 20                                   # conservative (v7x)
    vmem_limit = int(min(max(est, 32 << 20), int(0.85 * vmem_cap)))

    kernel = _make_kernel(n_scales, tdims, consts, has_mask)
    partials = pl.pallas_call(
        kernel,
        grid=(n, n_th, c),
        in_specs=in_specs,
        out_specs=out_spec,
        out_shape=jax.ShapeDtypeStruct((n_steps, 1, 1), jnp.float32),
        compiler_params=pltpu.CompilerParams(
            dimension_semantics=("parallel", "parallel", "arbitrary"),
            vmem_limit_bytes=vmem_limit),
    )(*args)
    return jnp.sum(partials)


# ---------------- pure-JAX reference (literal translation, for verification) ----------------
def _avgpool2_ref(x):  # NCHW
    n, c, h, w = x.shape
    h2, w2 = h // 2, w // 2
    return x[:, :, :2 * h2, :2 * w2].reshape(n, c, h2, 2, w2, 2).mean(axis=(3, 5))


def multiscale_l1_loss_ref(inp, target, mask=None, scale=5):
    weights = _WEIGHTS[:scale]
    loss = 0.0
    if mask is not None:
        mask = jnp.broadcast_to(mask, inp.shape)
    for i in range(scale):
        if mask is not None:
            loss = loss + weights[i] * jnp.mean(jnp.abs(inp * mask - target * mask))
        else:
            loss = loss + weights[i] * jnp.mean(jnp.abs(inp - target))
        if i != scale - 1:
            inp = _avgpool2_ref(inp)
            target = _avgpool2_ref(target)
            if mask is not None:
                mask = _avgpool2_ref(mask)
    return loss


if __name__ == "__main__":
    key = jax.random.PRNGKey(0)
    k1, k2, k3 = jax.random.split(key, 3)

    N, C, H, W = 2, 4, 16, 16
    x = jax.random.normal(k1, (N, C, H, W), dtype=jnp.float32)
    y = jax.random.normal(k2, (N, C, H, W), dtype=jnp.float32)
    mask = (jax.random.uniform(k3, (N, 1, H, W)) > 0.5).astype(jnp.float32)

    # no-mask path
    out = multiscale_l1_loss(x, y, mask=None, scale=5)
    jax.block_until_ready(out)
    ref = multiscale_l1_loss_ref(x, y, mask=None, scale=5)
    assert jnp.allclose(out, ref, rtol=1e-4, atol=1e-4), (out, ref)

    # masked path
    out_m = multiscale_l1_loss(x, y, mask=mask, scale=5)
    jax.block_until_ready(out_m)
    ref_m = multiscale_l1_loss_ref(x, y, mask=mask, scale=5)
    assert jnp.allclose(out_m, ref_m, rtol=1e-4, atol=1e-4), (out_m, ref_m)

    print("KERNEL_OK")
</pallas_src>

<mosaic_0001>
module attributes {stable_mosaic.version = 11 : i64} {
  func.func @kernel(%arg0: i32, %arg1: i32, %arg2: i32, %arg3: memref<1x1x16x16xf32, #tpu.memory_space<vmem>>, %arg4: memref<1x1x16x16xf32, #tpu.memory_space<vmem>>, %arg5: memref<1x1x1xf32, #tpu.memory_space<vmem>>) attributes {dimension_semantics = [#tpu.dimension_semantics<parallel>, #tpu.dimension_semantics<parallel>, #tpu.dimension_semantics<arbitrary>], iteration_bounds = array<i64: 2, 1, 4>, scalar_prefetch = 0 : i64, scratch_operands = 0 : i64, tpu.core_type = #tpu.core_type<tc>, window_params = [{transform_indices = @transform_0, window_bounds = array<i64: 1, 1, 16, 16>}, {transform_indices = @transform_1, window_bounds = array<i64: 1, 1, 16, 16>}, {transform_indices = @transform_2, window_bounds = array<i64: 1, 1, 1>}]} {
    %c0 = arith.constant 0 : index
    %c0_0 = arith.constant 0 : index
    %c0_1 = arith.constant 0 : index
    %c0_2 = arith.constant 0 : index
    %0 = vector.load %arg3[%c0, %c0_0, %c0_1, %c0_2] : memref<1x1x16x16xf32, #tpu.memory_space<vmem>>, vector<1x1x16x16xf32>
    %1 = vector.shape_cast %0 : vector<1x1x16x16xf32> to vector<16x16xf32>
    %c0_3 = arith.constant 0 : index
    %c0_4 = arith.constant 0 : index
    %c0_5 = arith.constant 0 : index
    %c0_6 = arith.constant 0 : index
    %2 = vector.load %arg4[%c0_3, %c0_4, %c0_5, %c0_6] : memref<1x1x16x16xf32, #tpu.memory_space<vmem>>, vector<1x1x16x16xf32>
    %3 = vector.shape_cast %2 : vector<1x1x16x16xf32> to vector<16x16xf32>
    %4 = arith.subf %1, %3 : vector<16x16xf32>
    %5 = math.absf %4 : vector<16x16xf32>
    %6 = vector.shape_cast %5 : vector<16x16xf32> to vector<1x16x16xf32>
    %cst = arith.constant dense<0.000000e+00> : vector<1xf32>
    %7 = vector.multi_reduction <add>, %6, %cst [1, 2] : vector<1x16x16xf32> to vector<1xf32>
    %8 = vector.shape_cast %7 : vector<1xf32> to vector<1x1x1xf32>
    %9 = vector.extract %8[0, 0, 0] : f32 from vector<1x1x1xf32>
    %cst_7 = arith.constant 4.8828125E-4 : f32
    %10 = arith.mulf %9, %cst_7 : f32
    %cst_8 = arith.constant 0.000000e+00 : f32
    %11 = arith.addf %cst_8, %10 : f32
    %12 = tpu.iota {dimensions = array<i32: 0>} : vector<16x8xi32>
    %13 = tpu.iota {dimensions = array<i32: 1>} : vector<16x8xi32>
    %c2_i32 = arith.constant 2 : i32
    %14 = vector.broadcast %c2_i32 : i32 to vector<16x8xi32>
    %15 = arith.muli %14, %13 : vector<16x8xi32>
    %16 = arith.cmpi eq, %12, %15 : vector<16x8xi32>
    %c2_i32_9 = arith.constant 2 : i32
    %17 = vector.broadcast %c2_i32_9 : i32 to vector<16x8xi32>
    %18 = arith.muli %17, %13 : vector<16x8xi32>
    %c1_i32 = arith.constant 1 : i32
    %19 = vector.broadcast %c1_i32 : i32 to vector<16x8xi32>
    %20 = arith.addi %18, %19 : vector<16x8xi32>
    %21 = arith.cmpi eq, %12, %20 : vector<16x8xi32>
    %22 = arith.ori %16, %21 : vector<16x8xi1>
    %cst_10 = arith.constant 5.000000e-01 : f32
    %cst_11 = arith.constant 0.000000e+00 : f32
    %23 = vector.broadcast %cst_10 : f32 to vector<16x8xf32>
    %24 = vector.broadcast %cst_11 : f32 to vector<16x8xf32>
    %25 = arith.select %22, %23, %24 : vector<16x8xi1>, vector<16x8xf32>
    %26 = tpu.iota {dimensions = array<i32: 0>} : vector<8x16xi32>
    %27 = tpu.iota {dimensions = array<i32: 1>} : vector<8x16xi32>
    %c2_i32_12 = arith.constant 2 : i32
    %28 = vector.broadcast %c2_i32_12 : i32 to vector<8x16xi32>
    %29 = arith.muli %28, %26 : vector<8x16xi32>
    %30 = arith.cmpi eq, %27, %29 : vector<8x16xi32>
    %c2_i32_13 = arith.constant 2 : i32
    %31 = vector.broadcast %c2_i32_13 : i32 to vector<8x16xi32>
    %32 = arith.muli %31, %26 : vector<8x16xi32>
    %c1_i32_14 = arith.constant 1 : i32
    %33 = vector.broadcast %c1_i32_14 : i32 to vector<8x16xi32>
    %34 = arith.addi %32, %33 : vector<8x16xi32>
    %35 = arith.cmpi eq, %27, %34 : vector<8x16xi32>
    %36 = arith.ori %30, %35 : vector<8x16xi1>
    %cst_15 = arith.constant 5.000000e-01 : f32
    %cst_16 = arith.constant 0.000000e+00 : f32
    %37 = vector.broadcast %cst_15 : f32 to vector<8x16xf32>
    %38 = vector.broadcast %cst_16 : f32 to vector<8x16xf32>
    %39 = arith.select %36, %37, %38 : vector<8x16xi1>, vector<8x16xf32>
    %cst_17 = arith.constant dense<0.000000e+00> : vector<16x8xf32>
    %40 = tpu.matmul %4, %25, %cst_17 {dimension_numbers = #tpu.dot_dimension_numbers<[1], [0], [0], [1], [0, 0, 1, 1], [], []>} : vector<16x16xf32>, vector<16x8xf32>, vector<16x8xf32> -> vector<16x8xf32>
    %cst_18 = arith.constant dense<0.000000e+00> : vector<8x8xf32>
    %41 = tpu.matmul %39, %40, %cst_18 {dimension_numbers = #tpu.dot_dimension_numbers<[1], [0], [0], [1], [0, 0, 1, 1], [], []>} : vector<8x16xf32>, vector<16x8xf32>, vector<8x8xf32> -> vector<8x8xf32>
    %42 = math.absf %41 : vector<8x8xf32>
    %43 = vector.shape_cast %42 : vector<8x8xf32> to vector<1x8x8xf32>
    %cst_19 = arith.constant dense<0.000000e+00> : vector<1xf32>
    %44 = vector.multi_reduction <add>, %43, %cst_19 [1, 2] : vector<1x8x8xf32> to vector<1xf32>
    %45 = vector.shape_cast %44 : vector<1xf32> to vector<1x1x1xf32>
    %46 = vector.extract %45[0, 0, 0] : f32 from vector<1x1x1xf32>
    %cst_20 = arith.constant 9.765625E-4 : f32
    %47 = arith.mulf %46, %cst_20 : f32
    %48 = arith.addf %11, %47 : f32
    %49 = tpu.iota {dimensions = array<i32: 0>} : vector<8x4xi32>
    %50 = tpu.iota {dimensions = array<i32: 1>} : vector<8x4xi32>
    %c2_i32_21 = arith.constant 2 : i32
    %51 = vector.broadcast %c2_i32_21 : i32 to vector<8x4xi32>
    %52 = arith.muli %51, %50 : vector<8x4xi32>
    %53 = arith.cmpi eq, %49, %52 : vector<8x4xi32>
    %c2_i32_22 = arith.constant 2 : i32
    %54 = vector.broadcast %c2_i32_22 : i32 to vector<8x4xi32>
    %55 = arith.muli %54, %50 : vector<8x4xi32>
    %c1_i32_23 = arith.constant 1 : i32
    %56 = vector.broadcast %c1_i32_23 : i32 to vector<8x4xi32>
    %57 = arith.addi %55, %56 : vector<8x4xi32>
    %58 = arith.cmpi eq, %49, %57 : vector<8x4xi32>
    %59 = arith.ori %53, %58 : vector<8x4xi1>
    %cst_24 = arith.constant 5.000000e-01 : f32
    %cst_25 = arith.constant 0.000000e+00 : f32
    %60 = vector.broadcast %cst_24 : f32 to vector<8x4xf32>
    %61 = vector.broadcast %cst_25 : f32 to vector<8x4xf32>
    %62 = arith.select %59, %60, %61 : vector<8x4xi1>, vector<8x4xf32>
    %63 = tpu.iota {dimensions = array<i32: 0>} : vector<4x8xi32>
    %64 = tpu.iota {dimensions = array<i32: 1>} : vector<4x8xi32>
    %c2_i32_26 = arith.constant 2 : i32
    %65 = vector.broadcast %c2_i32_26 : i32 to vector<4x8xi32>
    %66 = arith.muli %65, %63 : vector<4x8xi32>
    %67 = arith.cmpi eq, %64, %66 : vector<4x8xi32>
    %c2_i32_27 = arith.constant 2 : i32
    %68 = vector.broadcast %c2_i32_27 : i32 to vector<4x8xi32>
    %69 = arith.muli %68, %63 : vector<4x8xi32>
    %c1_i32_28 = arith.constant 1 : i32
    %70 = vector.broadcast %c1_i32_28 : i32 to vector<4x8xi32>
    %71 = arith.addi %69, %70 : vector<4x8xi32>
    %72 = arith.cmpi eq, %64, %71 : vector<4x8xi32>
    %73 = arith.ori %67, %72 : vector<4x8xi1>
    %cst_29 = arith.constant 5.000000e-01 : f32
    %cst_30 = arith.constant 0.000000e+00 : f32
    %74 = vector.broadcast %cst_29 : f32 to vector<4x8xf32>
    %75 = vector.broadcast %cst_30 : f32 to vector<4x8xf32>
    %76 = arith.select %73, %74, %75 : vector<4x8xi1>, vector<4x8xf32>
    %cst_31 = arith.constant dense<0.000000e+00> : vector<8x4xf32>
    %77 = tpu.matmul %41, %62, %cst_31 {dimension_numbers = #tpu.dot_dimension_numbers<[1], [0], [0], [1], [0, 0, 1, 1], [], []>} : vector<8x8xf32>, vector<8x4xf32>, vector<8x4xf32> -> vector<8x4xf32>
    %cst_32 = arith.constant dense<0.000000e+00> : vector<4x4xf32>
    %78 = tpu.matmul %76, %77, %cst_32 {dimension_numbers = #tpu.dot_dimension_numbers<[1], [0], [0], [1], [0, 0, 1, 1], [], []>} : vector<4x8xf32>, vector<8x4xf32>, vector<4x4xf32> -> vector<4x4xf32>
    %79 = math.absf %78 : vector<4x4xf32>
    %80 = vector.shape_cast %79 : vector<4x4xf32> to vector<1x4x4xf32>
    %cst_33 = arith.constant dense<0.000000e+00> : vector<1xf32>
    %81 = vector.multi_reduction <add>, %80, %cst_33 [1, 2] : vector<1x4x4xf32> to vector<1xf32>
    %82 = vector.shape_cast %81 : vector<1xf32> to vector<1x1x1xf32>
    %83 = vector.extract %82[0, 0, 0] : f32 from vector<1x1x1xf32>
    %cst_34 = arith.constant 0.001953125 : f32
    %84 = arith.mulf %83, %cst_34 : f32
    %85 = arith.addf %48, %84 : f32
    %86 = tpu.iota {dimensions = array<i32: 0>} : vector<4x2xi32>
    %87 = tpu.iota {dimensions = array<i32: 1>} : vector<4x2xi32>
    %c2_i32_35 = arith.constant 2 : i32
    %88 = vector.broadcast %c2_i32_35 : i32 to vector<4x2xi32>
    %89 = arith.muli %88, %87 : vector<4x2xi32>
    %90 = arith.cmpi eq, %86, %89 : vector<4x2xi32>
    %c2_i32_36 = arith.constant 2 : i32
    %91 = vector.broadcast %c2_i32_36 : i32 to vector<4x2xi32>
    %92 = arith.muli %91, %87 : vector<4x2xi32>
    %c1_i32_37 = arith.constant 1 : i32
    %93 = vector.broadcast %c1_i32_37 : i32 to vector<4x2xi32>
    %94 = arith.addi %92, %93 : vector<4x2xi32>
    %95 = arith.cmpi eq, %86, %94 : vector<4x2xi32>
    %96 = arith.ori %90, %95 : vector<4x2xi1>
    %cst_38 = arith.constant 5.000000e-01 : f32
    %cst_39 = arith.constant 0.000000e+00 : f32
    %97 = vector.broadcast %cst_38 : f32 to vector<4x2xf32>
    %98 = vector.broadcast %cst_39 : f32 to vector<4x2xf32>
    %99 = arith.select %96, %97, %98 : vector<4x2xi1>, vector<4x2xf32>
    %100 = tpu.iota {dimensions = array<i32: 0>} : vector<2x4xi32>
    %101 = tpu.iota {dimensions = array<i32: 1>} : vector<2x4xi32>
    %c2_i32_40 = arith.constant 2 : i32
    %102 = vector.broadcast %c2_i32_40 : i32 to vector<2x4xi32>
    %103 = arith.muli %102, %100 : vector<2x4xi32>
    %104 = arith.cmpi eq, %101, %103 : vector<2x4xi32>
    %c2_i32_41 = arith.constant 2 : i32
    %105 = vector.broadcast %c2_i32_41 : i32 to vector<2x4xi32>
    %106 = arith.muli %105, %100 : vector<2x4xi32>
    %c1_i32_42 = arith.constant 1 : i32
    %107 = vector.broadcast %c1_i32_42 : i32 to vector<2x4xi32>
    %108 = arith.addi %106, %107 : vector<2x4xi32>
    %109 = arith.cmpi eq, %101, %108 : vector<2x4xi32>
    %110 = arith.ori %104, %109 : vector<2x4xi1>
    %cst_43 = arith.constant 5.000000e-01 : f32
    %cst_44 = arith.constant 0.000000e+00 : f32
    %111 = vector.broadcast %cst_43 : f32 to vector<2x4xf32>
    %112 = vector.broadcast %cst_44 : f32 to vector<2x4xf32>
    %113 = arith.select %110, %111, %112 : vector<2x4xi1>, vector<2x4xf32>
    %cst_45 = arith.constant dense<0.000000e+00> : vector<4x2xf32>
    %114 = tpu.matmul %78, %99, %cst_45 {dimension_numbers = #tpu.dot_dimension_numbers<[1], [0], [0], [1], [0, 0, 1, 1], [], []>} : vector<4x4xf32>, vector<4x2xf32>, vector<4x2xf32> -> vector<4x2xf32>
    %cst_46 = arith.constant dense<0.000000e+00> : vector<2x2xf32>
    %115 = tpu.matmul %113, %114, %cst_46 {dimension_numbers = #tpu.dot_dimension_numbers<[1], [0], [0], [1], [0, 0, 1, 1], [], []>} : vector<2x4xf32>, vector<4x2xf32>, vector<2x2xf32> -> vector<2x2xf32>
    %116 = math.absf %115 : vector<2x2xf32>
    %117 = vector.shape_cast %116 : vector<2x2xf32> to vector<1x2x2xf32>
    %cst_47 = arith.constant dense<0.000000e+00> : vector<1xf32>
    %118 = vector.multi_reduction <add>, %117, %cst_47 [1, 2] : vector<1x2x2xf32> to vector<1xf32>
    %119 = vector.shape_cast %118 : vector<1xf32> to vector<1x1x1xf32>
    %120 = vector.extract %119[0, 0, 0] : f32 from vector<1x1x1xf32>
    %cst_48 = arith.constant 3.906250e-03 : f32
    %121 = arith.mulf %120, %cst_48 : f32
    %122 = arith.addf %85, %121 : f32
    %123 = tpu.iota {dimensions = array<i32: 0>} : vector<2x1xi32>
    %124 = tpu.iota {dimensions = array<i32: 1>} : vector<2x1xi32>
    %c2_i32_49 = arith.constant 2 : i32
    %125 = vector.broadcast %c2_i32_49 : i32 to vector<2x1xi32>
    %126 = arith.muli %125, %124 : vector<2x1xi32>
    %127 = arith.cmpi eq, %123, %126 : vector<2x1xi32>
    %c2_i32_50 = arith.constant 2 : i32
    %128 = vector.broadcast %c2_i32_50 : i32 to vector<2x1xi32>
    %129 = arith.muli %128, %124 : vector<2x1xi32>
    %c1_i32_51 = arith.constant 1 : i32
    %130 = vector.broadcast %c1_i32_51 : i32 to vector<2x1xi32>
    %131 = arith.addi %129, %130 : vector<2x1xi32>
    %132 = arith.cmpi eq, %123, %131 : vector<2x1xi32>
    %133 = arith.ori %127, %132 : vector<2x1xi1>
    %cst_52 = arith.constant 5.000000e-01 : f32
    %cst_53 = arith.constant 0.000000e+00 : f32
    %134 = vector.broadcast %cst_52 : f32 to vector<2x1xf32>
    %135 = vector.broadcast %cst_53 : f32 to vector<2x1xf32>
    %136 = arith.select %133, %134, %135 : vector<2x1xi1>, vector<2x1xf32>
    %137 = tpu.iota {dimensions = array<i32: 0>} : vector<1x2xi32>
    %138 = tpu.iota {dimensions = array<i32: 1>} : vector<1x2xi32>
    %c2_i32_54 = arith.constant 2 : i32
    %139 = vector.broadcast %c2_i32_54 : i32 to vector<1x2xi32>
    %140 = arith.muli %139, %137 : vector<1x2xi32>
    %141 = arith.cmpi eq, %138, %140 : vector<1x2xi32>
    %c2_i32_55 = arith.constant 2 : i32
    %142 = vector.broadcast %c2_i32_55 : i32 to vector<1x2xi32>
    %143 = arith.muli %142, %137 : vector<1x2xi32>
    %c1_i32_56 = arith.constant 1 : i32
    %144 = vector.broadcast %c1_i32_56 : i32 to vector<1x2xi32>
    %145 = arith.addi %143, %144 : vector<1x2xi32>
    %146 = arith.cmpi eq, %138, %145 : vector<1x2xi32>
    %147 = arith.ori %141, %146 : vector<1x2xi1>
    %cst_57 = arith.constant 5.000000e-01 : f32
    %cst_58 = arith.constant 0.000000e+00 : f32
    %148 = vector.broadcast %cst_57 : f32 to vector<1x2xf32>
    %149 = vector.broadcast %cst_58 : f32 to vector<1x2xf32>
    %150 = arith.select %147, %148, %149 : vector<1x2xi1>, vector<1x2xf32>
    %cst_59 = arith.constant dense<0.000000e+00> : vector<2x1xf32>
    %151 = tpu.matmul %115, %136, %cst_59 {dimension_numbers = #tpu.dot_dimension_numbers<[1], [0], [0], [1], [0, 0, 1, 1], [], []>} : vector<2x2xf32>, vector<2x1xf32>, vector<2x1xf32> -> vector<2x1xf32>
    %cst_60 = arith.constant dense<0.000000e+00> : vector<1x1xf32>
    %152 = tpu.matmul %150, %151, %cst_60 {dimension_numbers = #tpu.dot_dimension_numbers<[1], [0], [0], [1], [0, 0, 1, 1], [], []>} : vector<1x2xf32>, vector<2x1xf32>, vector<1x1xf32> -> vector<1x1xf32>
    %153 = math.absf %152 : vector<1x1xf32>
    %154 = vector.shape_cast %153 : vector<1x1xf32> to vector<1x1x1xf32>
    %cst_61 = arith.constant dense<0.000000e+00> : vector<1xf32>
    %155 = vector.multi_reduction <add>, %154, %cst_61 [1, 2] : vector<1x1x1xf32> to vector<1xf32>
    %156 = vector.shape_cast %155 : vector<1xf32> to vector<1x1x1xf32>
    %157 = vector.extract %156[0, 0, 0] : f32 from vector<1x1x1xf32>
    %cst_62 = arith.constant 1.562500e-02 : f32
    %158 = arith.mulf %157, %cst_62 : f32
    %159 = arith.addf %122, %158 : f32
    %160 = vector.broadcast %159 : f32 to vector<1x1x1xf32>
    %c0_63 = arith.constant 0 : index
    %c0_64 = arith.constant 0 : index
    %c0_65 = arith.constant 0 : index
    %161 = vector.load %arg5[%c0_63, %c0_64, %c0_65] : memref<1x1x1xf32, #tpu.memory_space<vmem>>, vector<1x1x1xf32>
    tpu.vector_store %arg5[%c0_63, %c0_64, %c0_65], %160 {strides = array<i32>} : memref<1x1x1xf32, #tpu.memory_space<vmem>>, vector<1x1x1xf32>,
    return
  }
  func.func @transform_0(%arg0: i32, %arg1: i32, %arg2: i32) -> (i32, i32, i32, i32) {
    %c0_i32 = arith.constant 0 : i32
    %c0_i32_0 = arith.constant 0 : i32
    return %arg0, %arg2, %arg1, %c0_i32 : i32, i32, i32, i32
  }
  func.func @transform_1(%arg0: i32, %arg1: i32, %arg2: i32) -> (i32, i32, i32, i32) {
    %c0_i32 = arith.constant 0 : i32
    %c0_i32_0 = arith.constant 0 : i32
    return %arg0, %arg2, %arg1, %c0_i32 : i32, i32, i32, i32
  }
  func.func @transform_2(%arg0: i32, %arg1: i32, %arg2: i32) -> (i32, i32, i32) {
    %c1_i32 = arith.constant 1 : i32
    %0 = arith.muli %arg0, %c1_i32 : i32
    %1 = arith.addi %0, %arg1 : i32
    %c4_i32 = arith.constant 4 : i32
    %2 = arith.muli %1, %c4_i32 : i32
    %3 = arith.addi %2, %arg2 : i32
    %c0_i32 = arith.constant 0 : i32
    %c0_i32_0 = arith.constant 0 : i32
    %c0_i32_1 = arith.constant 0 : i32
    return %3, %c0_i32, %c0_i32_0 : i32, i32, i32
  }
}

</mosaic_0001>

<llo_original>
// kernel: tpu_custom_call.1
$region0: #{tpu_custom_call.1}
  #allocation0 [shape = 'u32[]', space=smem, size = 0x4, offset = 0x4, fixed_abs, tag = 'smem constant byte address 0x4 - core index']
  #allocation1 [shape = 'u32[144,128]{1,0:T(1,128)}', space=vmem, size = 0x12000, scoped, tag = 'internal scratch']
  %s0 = inlined_call_operand.hbm [shape: f32[2,4,16,16], index: 0, kind: input, shape index: {}]
  %s1 = inlined_call_operand.hbm [shape: f32[2,4,16,16], index: 1, kind: input, shape index: {}]
  %s2 = inlined_call_operand.vmem [shape: f32[8,1,1], index: 2, kind: output, shape index: {}]
  %s3 = sld [smem:[#allocation0]]
  $region49: #{tpu_custom_call.1} parent=0
    _
  %s5 = ssub.s32 1, %s3
  %s6 = scalar_select 0, %s5, %s3
  $region1: #{tpu_custom_call.1} parent=0
    #allocation2 [shape = 'u8[16384]{0}', space=vmem, size = 0x4000, scoped, tag = 'input window, operand 0']
    #allocation3 [shape = 's32[2]{0}', space=sflag, size = 0x8, scoped, tag = 'scoped memory for tpu_custom_call.1']
    #allocation4 [shape = 'u8[16384]{0}', space=vmem, size = 0x4000, scoped, tag = 'input window, operand 1']
    #allocation5 [shape = 's32[2]{0}', space=sflag, size = 0x8, scoped, tag = 'scoped memory for tpu_custom_call.1']
    %7 = vsyncpa [#allocation3], 0
    %s8 = scalar_lea.sflag [#allocation3], 1
    %9 = vsyncpa %s8, 0
    %10 = vsyncpa [#allocation5], 0
    %s11 = scalar_lea.sflag [#allocation5], 1
    %12 = vsyncpa %s11, 0
    loop: start=0, step=1, limit=10
    $region2: #{tpu_custom_call.1} parent=1 // loop_pre_header
      _
    $region3: #{tpu_custom_call.1} parent=1 // loop_header
      %s14 = sphi 0, %s18
      %p15 = scmp.ge.s32.totalorder %s14, 10
      %s21 = sphi 0, %s40
      %s22 = sphi 0, %s36
      %s23 = sphi 0, %s32
      %s24 = sphi 0, %s21
      %s25 = sphi 0, %s22
      %s26 = sphi 0, %s23
      %s27 = sphi 0, %s24
      %s28 = sphi 0, %s25
      %s29 = sphi 0, %s26
      %s47 = sphi 0, %s49
      %s50 = sphi 0, %s47
      %s51 = sphi 0, %s50
      %s67 = sphi 0, %s51
      %s77 = sphi 0, %s79
      %s80 = sphi 0, %s77
      %s81 = sphi 0, %s80
      %s97 = sphi 0, %s81
      %s109 = sphi 0, %s111
      %s112 = sphi 0, %s109
      %s113 = sphi 0, %s112
      %s129 = sphi 0, %s113
    $region4: #{tpu_custom_call.1} parent=1 // loop_header_branch
      %17 = sbr.rel (%p15) target = $region8
    $region5: #{tpu_custom_call.1} parent=1 // loop_body
      %s19 = ssub.s32 %s14, 1
      %s20 = ssub.s32 %s14, 2
      %s30 = sadd.s32 1, %s23
      %p31 = scmp.ge.s32.totalorder %s30, 4
      %s32 = scalar_select %p31, 0, %s30
      %s33 = sadd.s32 1, %s22
      %s34 = scalar_select %p31, %s33, %s22
      %p35 = scmp.ge.s32.totalorder %s34, 1
      %s36 = scalar_select %p35, 0, %s34
      %s37 = sadd.s32 1, %s21
      %s38 = scalar_select %p35, %s37, %s21
      %p39 = scmp.ge.s32.totalorder %s38, 2
      %s40 = scalar_select %p39, 0, %s38
      %s41 = ssub.s32 %s21, %s40
      %s42 = ssub.s32 %s23, %s32
      %s43 = sor.u32 %s41, %s42
      %s44 = ssub.s32 %s22, %s36
      %s45 = sor.u32 %s43, %s44
      %p46 = scmp.eq.s32.totalorder %s45, 0
      %s48 = sadd.s32 %s47, 1
      %s49 = scalar_select %p46, %s47, %s48
      %p52 = pneg %p46
      %p53 = scmp.eq.s32.totalorder %s14, 7
      %p54 = por %p52, %p53
      %p55 = scmp.ne.s32.totalorder %s47, %s50
      %p56 = scmp.eq.s32.totalorder %s14, 0
      %p57 = por %p55, %p56
      %p58 = scmp.ne.s32.totalorder %s47, %s50
      %p59 = scmp.eq.s32.totalorder %s19, 7
      %p60 = por %p58, %p59
      %p61 = scmp.ne.s32.totalorder %s50, %s51
      %p62 = scmp.eq.s32.totalorder %s19, 0
      %p63 = por %p61, %p62
      %p64 = scmp.ne.s32.totalorder %s50, %s51
      %p65 = scmp.eq.s32.totalorder %s20, 7
      %p66 = por %p64, %p65
      %p68 = scmp.ne.s32.totalorder %s51, %s67
      %p69 = scmp.eq.s32.totalorder %s20, 0
      %p70 = por %p68, %p69
      %s71 = ssub.s32 %s21, %s40
      %s72 = ssub.s32 %s23, %s32
      %s73 = sor.u32 %s71, %s72
      %s74 = ssub.s32 %s22, %s36
      %s75 = sor.u32 %s73, %s74
      %p76 = scmp.eq.s32.totalorder %s75, 0
      %s78 = sadd.s32 %s77, 1
      %s79 = scalar_select %p76, %s77, %s78
      %p82 = pneg %p76
      %p83 = scmp.eq.s32.totalorder %s14, 7
      %p84 = por %p82, %p83
      %p85 = scmp.ne.s32.totalorder %s77, %s80
      %p86 = scmp.eq.s32.totalorder %s14, 0
      %p87 = por %p85, %p86
      %p88 = scmp.ne.s32.totalorder %s77, %s80
      %p89 = scmp.eq.s32.totalorder %s19, 7
      %p90 = por %p88, %p89
      %p91 = scmp.ne.s32.totalorder %s80, %s81
      %p92 = scmp.eq.s32.totalorder %s19, 0
      %p93 = por %p91, %p92
      %p94 = scmp.ne.s32.totalorder %s80, %s81
      %p95 = scmp.eq.s32.totalorder %s20, 7
      %p96 = por %p94, %p95
      %p98 = scmp.ne.s32.totalorder %s81, %s97
      %p99 = scmp.eq.s32.totalorder %s20, 0
      %p100 = por %p98, %p99
      %s101 = sadd.s32 %s21, %s22
      %s102 = smul.u32 %s101, 4
      %s103 = sadd.s32 %s102, %s23
      %s104 = sadd.s32 %s40, %s36
      %s105 = smul.u32 %s104, 4
      %s106 = sadd.s32 %s105, %s32
      %s107 = ssub.s32 %s103, %s106
      %p108 = scmp.eq.s32.totalorder %s107, 0
      %s110 = sadd.s32 %s109, 1
      %s111 = scalar_select %p108, %s109, %s110
      %p114 = pneg %p108
      %p115 = scmp.eq.s32.totalorder %s14, 7
      %p116 = por %p114, %p115
      %p117 = scmp.ne.s32.totalorder %s109, %s112
      %p118 = scmp.eq.s32.totalorder %s14, 0
      %p119 = por %p117, %p118
      %p120 = scmp.ne.s32.totalorder %s109, %s112
      %p121 = scmp.eq.s32.totalorder %s19, 7
      %p122 = por %p120, %p121
      %p123 = scmp.ne.s32.totalorder %s112, %s113
      %p124 = scmp.eq.s32.totalorder %s19, 0
      %p125 = por %p123, %p124
      %p126 = scmp.ne.s32.totalorder %s112, %s113
      %p127 = scmp.eq.s32.totalorder %s20, 7
      %p128 = por %p126, %p127
      %p130 = scmp.ne.s32.totalorder %s113, %s129
      %p131 = scmp.eq.s32.totalorder %s20, 0
      %p132 = por %p130, %p131
      %p133 = scmp.le.s32.totalorder 1, %s14
      %p134 = scmp.lt.s32.totalorder %s14, 9
      %p135 = pnand %p133, %p134
      %p136 = pneg %p135
      // Predicated region
      $region9: #{tpu_custom_call.1} parent=5 // pred_check
        _
      $region10: #{tpu_custom_call.1} parent=5 // pred_check_branch
        %138 = sbr.rel (%p135) target = $region12
      $region11: #{tpu_custom_call.1} parent=5 // pred_region
        %s139 = ssub.s32 %s14, 1
      $region12: #{tpu_custom_call.1} parent=5 // pred_fallthru
        _
      %p140 = scmp.lt.s32.totalorder %s14, 8
      // Predicated region
      $region13: #{tpu_custom_call.1} parent=5 // pred_check
        %p141 = pneg %p140
      $region14: #{tpu_custom_call.1} parent=5 // pred_check_branch
        %143 = sbr.rel (%p141) target = $region16
      $region15: #{tpu_custom_call.1} parent=5 // pred_region
        // Predicated region
        $region17: #{tpu_custom_call.1} parent=15 // pred_check
          %p144 = pneg %p57
        $region18: #{tpu_custom_call.1} parent=15 // pred_check_branch
          %146 = sbr.rel (%p144) target = $region20
        $region19: #{tpu_custom_call.1} parent=15 // pred_region
          %s147 = sand.u32 %s47, 1
          %s148 = scalar_lea.sflag [#allocation3], %s147
          %s149 = sand.u32 %s47, 1
          %s150 = smul.addr %s149, 16
          %s151 = scalar_lea.vmem [#allocation2], %s150
          %s152 = smul.u32 2, %s22
          %s154 = ssub.s32 256, 256
          %155 = vsyncadd %s148, %s154
          %s156 = smul.addr %s23, 2
          %s157 = sadd.s32 %s152, %s156
          %s158 = smul.addr %s21, 8
          %s159 = sadd.s32 %s157, %s158
          %s160 = smul.addr %s159, 128
          %s161 = scalar_lea.hbm %s0, %s160
          %s162 = sshll.u32 %s151, 4
          %s163 = int_to_ptr.vmem [resolvable:$true] %s162
          %168 = dma.hbm_to_vmem [thread:$0]  %s161, 256, %s163, %s148, 128, 128, 8
        $region20: #{tpu_custom_call.1} parent=15 // pred_fallthru
          _
        // Predicated region
        $region21: #{tpu_custom_call.1} parent=15 // pred_check
          %p169 = pneg %p87
        $region22: #{tpu_custom_call.1} parent=15 // pred_check_branch
          %171 = sbr.rel (%p169) target = $region24
        $region23: #{tpu_custom_call.1} parent=15 // pred_region
          %s172 = sand.u32 %s77, 1
          %s173 = scalar_lea.sflag [#allocation5], %s172
          %s174 = sand.u32 %s77, 1
          %s175 = smul.addr %s174, 16
          %s176 = scalar_lea.vmem [#allocation4], %s175
          %s177 = smul.u32 2, %s22
          %s179 = ssub.s32 256, 256
          %180 = vsyncadd %s173, %s179
          %s181 = smul.addr %s23, 2
          %s182 = sadd.s32 %s177, %s181
          %s183 = smul.addr %s21, 8
          %s184 = sadd.s32 %s182, %s183
          %s185 = smul.addr %s184, 128
          %s186 = scalar_lea.hbm %s1, %s185
          %s187 = sshll.u32 %s176, 4
          %s188 = int_to_ptr.vmem [resolvable:$true] %s187
          %193 = dma.hbm_to_vmem [thread:$0]  %s186, 256, %s188, %s173, 128, 128, 8
        $region24: #{tpu_custom_call.1} parent=15 // pred_fallthru
          _
      $region16: #{tpu_custom_call.1} parent=5 // pred_fallthru
        _
      %p194 = scmp.le.s32.totalorder 1, %s14
      %p195 = scmp.lt.s32.totalorder %s14, 9
      %p196 = pnand %p194, %p195
      %p197 = pneg %p196
      // Predicated region
      $region25: #{tpu_custom_call.1} parent=5 // pred_check
        _
      $region26: #{tpu_custom_call.1} parent=5 // pred_check_branch
        %199 = sbr.rel (%p196) target = $region28
      $region27: #{tpu_custom_call.1} parent=5 // pred_region
        %s200 = ssub.s32 %s14, 1
        %s201 = sand.u32 %s50, 1
        %s202 = scalar_lea.sflag [#allocation3], %s201
        %s203 = sand.u32 %s50, 1
        %s204 = smul.addr %s203, 16
        %s205 = scalar_lea.vmem [#allocation2], %s204
        // Predicated region
        $region29: #{tpu_custom_call.1} parent=27 // pred_check
          %p206 = pneg %p63
        $region30: #{tpu_custom_call.1} parent=27 // pred_check_branch
          %208 = sbr.rel (%p206) target = $region32
        $region31: #{tpu_custom_call.1} parent=27 // pred_region
          %209 = dma.done %s202, 256
        $region32: #{tpu_custom_call.1} parent=27 // pred_fallthru
          _
        %s210 = sand.u32 %s80, 1
        %s211 = scalar_lea.sflag [#allocation5], %s210
        %s212 = sand.u32 %s80, 1
        %s213 = smul.addr %s212, 16
        %s214 = scalar_lea.vmem [#allocation4], %s213
        // Predicated region
        $region33: #{tpu_custom_call.1} parent=27 // pred_check
          %p215 = pneg %p93
        $region34: #{tpu_custom_call.1} parent=27 // pred_check_branch
          %217 = sbr.rel (%p215) target = $region36
        $region35: #{tpu_custom_call.1} parent=27 // pred_region
          %218 = dma.done %s211, 256
        $region36: #{tpu_custom_call.1} parent=27 // pred_fallthru
          _
        %s219 = sand.u32 %s50, 1
        %s220 = scalar_lea.sflag [#allocation3], %s219
        %s221 = sand.u32 %s50, 1
        %s222 = smul.addr %s221, 16
        %s223 = scalar_lea.vmem [#allocation2], %s222
        %p224 = pneg %p63
        %p225 = pneg %p60
        %s226 = sand.u32 %s80, 1
        %s227 = scalar_lea.sflag [#allocation5], %s226
        %s228 = sand.u32 %s80, 1
        %s229 = smul.addr %s228, 16
        %s230 = scalar_lea.vmem [#allocation4], %s229
        %p231 = pneg %p93
        %p232 = pneg %p90
        %p233 = pneg %p125
        %p234 = pneg %p122
        %s235 = sadd.s32 %s24, %s25
        %s236 = smul.u32 %s235, 4
        %s237 = sadd.s32 %s236, %s26
        %p238 = scmp.lt.s32.totalorder %s237, 7
        %s239 = scalar_select %p238, %s237, 7
        %s240 = scalar_lea.vmem %s2, %s239
        %s241 = smul.u32 2, %s25
        %s242 = smul.u32 2, %s25
        %s243 = sadd.s32 %s24, %s25
        %s244 = smul.u32 %s243, 4
        %s245 = sadd.s32 %s244, %s26
        %p246 = scmp.lt.s32.totalorder %s245, 7
        %s247 = scalar_select %p246, %s245, 7
        %s248 = scalar_lea.vmem %s2, %s247
        %s249 = sadd.s32 %s24, %s25
        %s250 = smul.u32 %s249, 4
        %s251 = sadd.s32 %s250, %s26
        %v252 = vld [vmem:[%s205] sm:$0xff]
        %v253 = vld [vmem:[%s205 + $0x8] sm:$0xff]
        %v254 = vld [vmem:[%s214] sm:$0xff]
        %v255 = vld [vmem:[%s214 + $0x8] sm:$0xff]
        %v256 = vsub.f32 %v252, %v254
        %v257 = vsub.f32 %v253, %v255
        %v258 = vand.u32 2147483647, %v256
        %v259 = vand.u32 2147483647, %v257
        %vm260 = vcmask 130048
        %v261 = vsel %vm260, %v258, 0.0
        %v262 = vsel %vm260, %v259, 0.0
        %v263 = vadd.f32 %v261, %v262
        %264 = vadd.xlane.f32.xlu0 %v263
        %v265 = vpop.xlane.xlu0 %264
        %v266 = vrot.slane %v265, 4
        %v267 = vadd.f32 %v265, %v266
        %v268 = vrot.slane %v267, 2
        %v269 = vadd.f32 %v267, %v268
        %v270 = vrot.slane %v269, 1
        %v271 = vadd.f32 %v269, %v270
        %s272 = vtos %v271
        %s273 = smul.f32 %s272, 0.00048828125
        %s274 = sadd.f32 %s273, 0.0
        %v275 = vlaneseq
        %v276 = vshrl.u32 %v275, 7
        %v277 = vadd.s32 %v276, 8
        %v278 = vlaneseq
        %v279 = vand.u32 %v278, 127
        %v280 = vmul.u32 %v279, 2
        %vm281 = vcmp.eq.s32.totalorder %v276, %v280
        %vm282 = vcmp.eq.s32.totalorder %v277, %v280
        %v283 = vadd.s32 %v280, 1
        %vm284 = vcmp.eq.s32.totalorder %v276, %v283
        %vm285 = vcmp.eq.s32.totalorder %v277, %v283
        %vm286 = vmor %vm281, %vm284
        %vm287 = vmor %vm282, %vm285
        %v288 = vsel %vm286, 0.5, 0.0
        %v289 = vsel %vm287, 0.5, 0.0
        %v290 = vmul.u32 %v276, 2
        %vm291 = vcmp.eq.s32.totalorder %v279, %v290
        %v292 = vadd.s32 %v290, 1
        %vm293 = vcmp.eq.s32.totalorder %v279, %v292
        %vm294 = vmor %vm291, %vm293
        %v295 = vsel %vm294, 0.5, 0.0
        %v297 = vsel %vm260, %v256, 0
        %v300 = vsel %vm260, %v257, 0
        %302 = vmatprep.subr.mxu0 0.0
        %303 = vmatpush1.msra.mxu0 0.0
        %304 = vmatprep.subr.mxu0 0.0
        %305 = vmatpush1.msra.mxu0 0.0
        %306 = vmatprep.subr.mxu0 0.0
        %307 = vmatpush1.msra.mxu0 0.0
        %308 = vmatprep.subr.mxu0 0.0
        %309 = vmatpush1.msra.mxu0 0.0
        %310 = vmatprep.subr.mxu0 0.0
        %311 = vmatpush1.msra.mxu0 0.0
        %312 = vmatprep.subr.mxu0 0.0
        %313 = vmatpush1.msra.mxu0 0.0
        %314 = vmatprep.subr.mxu0 0.0
        %315 = vmatpush1.msra.mxu0 0.0
        %316 = vmatprep.subr.mxu0 0.0
        %317 = vmatpush1.msra.mxu0 0.0
        %318 = vmatprep.subr.mxu0 0.0
        %319 = vmatpush1.msra.mxu0 0.0
        %320 = vmatprep.subr.mxu0 0.0
        %321 = vmatpush1.msra.mxu0 0.0
        %322 = vmatprep.subr.mxu0 0.0
        %323 = vmatpush1.msra.mxu0 0.0
        %324 = vmatprep.subr.mxu0 0.0
        %325 = vmatpush1.msra.mxu0 0.0
        %326 = vmatprep.subr.mxu0 0.0
        %327 = vmatpush1.msra.mxu0 0.0
        %328 = vmatprep.subr.mxu0 0.0
        %329 = vmatpush1.msra.mxu0 0.0
        %330 = vmatprep.subr.mxu0 0.0
        %331 = vmatpush1.msra.mxu0 %v289
        %332 = vmatprep.subr.mxu0 0.0
        %333 = vmatpush1.msra.mxu0 %v288
        %334 = vmatprep.subr.mxu0 0.0
        %335 = vmatpush2.msra.mxu0 0.0
        %336 = vmatprep.subr.mxu0 0.0
        %337 = vmatpush2.msra.mxu0 0.0
        %338 = vmatprep.subr.mxu0 0.0
        %339 = vmatpush2.msra.mxu0 0.0
        %340 = vmatprep.subr.mxu0 0.0
        %341 = vmatpush2.msra.mxu0 0.0
        %342 = vmatprep.subr.mxu0 0.0
        %343 = vmatpush2.msra.mxu0 0.0
        %344 = vmatprep.subr.mxu0 0.0
        %345 = vmatpush2.msra.mxu0 0.0
        %346 = vmatprep.subr.mxu0 0.0
        %347 = vmatpush2.msra.mxu0 0.0
        %348 = vmatprep.subr.mxu0 0.0
        %349 = vmatpush2.msra.mxu0 0.0
        %350 = vmatprep.subr.mxu0 0.0
        %351 = vmatpush2.msra.mxu0 0.0
        %352 = vmatprep.subr.mxu0 0.0
        %353 = vmatpush2.msra.mxu0 0.0
        %354 = vmatprep.subr.mxu0 0.0
        %355 = vmatpush2.msra.mxu0 0.0
        %356 = vmatprep.subr.mxu0 0.0
        %357 = vmatpush2.msra.mxu0 0.0
        %358 = vmatprep.subr.mxu0 0.0
        %359 = vmatpush2.msra.mxu0 0.0
        %360 = vmatprep.subr.mxu0 0.0
        %361 = vmatpush2.msra.mxu0 0.0
        %362 = vmatprep.subr.mxu0 0.0
        %363 = vmatpush2.msra.mxu0 0.0
        %364 = vmatprep.subr.mxu0 0.0
        %365 = vmatpush2.msra.mxu0 0.0
        %366 = vmatprep.mubr.f32.mxu0 0.0
        %367 = vmatmul.mubr.f32.gmra.mxu0 %v297
        %v368 = vpop.f32.mrf.mxu0
        %v369 = vadd.f32 0.0, %v368
        %v370 = vpop.f32.mrf.mxu0
        %371 = vmatprep.mubr.f32.mxu0 0.0
        %372 = vmatmul.mubr.f32.gmra.mxu0 %v300
        %v373 = vpop.f32.mrf.mxu0
        %v374 = vadd.f32 0.0, %v373
        %v375 = vpop.f32.mrf.mxu0
        %376 = vdwg.mxu0
        %v378 = vsel %vm260, %v295, 0
        %380 = vmatprep.subr.mxu0 0.0
        %381 = vmatpush1.msra.mxu0 0.0
        %382 = vmatprep.subr.mxu0 0.0
        %383 = vmatpush1.msra.mxu0 0.0
        %384 = vmatprep.subr.mxu0 0.0
        %385 = vmatpush1.msra.mxu0 0.0
        %386 = vmatprep.subr.mxu0 0.0
        %387 = vmatpush1.msra.mxu0 0.0
        %388 = vmatprep.subr.mxu0 0.0
        %389 = vmatpush1.msra.mxu0 0.0
        %390 = vmatprep.subr.mxu0 0.0
        %391 = vmatpush1.msra.mxu0 0.0
        %392 = vmatprep.subr.mxu0 0.0
        %393 = vmatpush1.msra.mxu0 0.0
        %394 = vmatprep.subr.mxu0 0.0
        %395 = vmatpush1.msra.mxu0 0.0
        %396 = vmatprep.subr.mxu0 0.0
        %397 = vmatpush1.msra.mxu0 0.0
        %398 = vmatprep.subr.mxu0 0.0
        %399 = vmatpush1.msra.mxu0 0.0
        %400 = vmatprep.subr.mxu0 0.0
        %401 = vmatpush1.msra.mxu0 0.0
        %402 = vmatprep.subr.mxu0 0.0
        %403 = vmatpush1.msra.mxu0 0.0
        %404 = vmatprep.subr.mxu0 0.0
        %405 = vmatpush1.msra.mxu0 0.0
        %406 = vmatprep.subr.mxu0 0.0
        %407 = vmatpush1.msra.mxu0 0.0
        %408 = vmatprep.subr.mxu0 0.0
        %409 = vmatpush1.msra.mxu0 %v374
        %410 = vmatprep.subr.mxu0 0.0
        %411 = vmatpush1.msra.mxu0 %v369
        %412 = vmatprep.subr.mxu0 0.0
        %413 = vmatpush2.msra.mxu0 0.0
        %414 = vmatprep.subr.mxu0 0.0
        %415 = vmatpush2.msra.mxu0 0.0
        %416 = vmatprep.subr.mxu0 0.0
        %417 = vmatpush2.msra.mxu0 0.0
        %418 = vmatprep.subr.mxu0 0.0
        %419 = vmatpush2.msra.mxu0 0.0
        %420 = vmatprep.subr.mxu0 0.0
        %421 = vmatpush2.msra.mxu0 0.0
        %422 = vmatprep.subr.mxu0 0.0
        %423 = vmatpush2.msra.mxu0 0.0
        %424 = vmatprep.subr.mxu0 0.0
        %425 = vmatpush2.msra.mxu0 0.0
        %426 = vmatprep.subr.mxu0 0.0
        %427 = vmatpush2.msra.mxu0 0.0
        %428 = vmatprep.subr.mxu0 0.0
        %429 = vmatpush2.msra.mxu0 0.0
        %430 = vmatprep.subr.mxu0 0.0
        %431 = vmatpush2.msra.mxu0 0.0
        %432 = vmatprep.subr.mxu0 0.0
        %433 = vmatpush2.msra.mxu0 0.0
        %434 = vmatprep.subr.mxu0 0.0
        %435 = vmatpush2.msra.mxu0 0.0
        %436 = vmatprep.subr.mxu0 0.0
        %437 = vmatpush2.msra.mxu0 0.0
        %438 = vmatprep.subr.mxu0 0.0
        %439 = vmatpush2.msra.mxu0 0.0
        %440 = vmatprep.subr.mxu0 0.0
        %441 = vmatpush2.msra.mxu0 0.0
        %442 = vmatprep.subr.mxu0 0.0
        %443 = vmatpush2.msra.mxu0 0.0
        %444 = vmatprep.mubr.f32.mxu0 0.0
        %445 = vmatmul.mubr.f32.gmra.mxu0 %v378
        %v446 = vpop.f32.mrf.mxu0
        %v447 = vadd.f32 0.0, %v446
        %v448 = vpop.f32.mrf.mxu0
        %449 = vdwg.mxu0
        %v450 = vand.u32 2147483647, %v447
        %vm451 = vcmask 64512
        %v452 = vsel %vm451, %v450, 0.0
        %453 = vadd.xlane.f32.xlu0 %v452
        %v454 = vpop.xlane.xlu0 %453
        %v455 = vrot.slane %v454, 4
        %v456 = vadd.f32 %v454, %v455
        %v457 = vrot.slane %v456, 2
        %v458 = vadd.f32 %v456, %v457
        %v459 = vrot.slane %v458, 1
        %v460 = vadd.f32 %v458, %v459
        %s461 = vtos %v460
        %s462 = smul.f32 %s461, 0.0009765625
        %s463 = sadd.f32 %s274, %s462
        %v465 = vsel %vm451, %v447, 0
        %467 = vmatprep.subr.mxu0 0.0
        %468 = vmatpush1.msra.mxu0 0.0
        %469 = vmatprep.subr.mxu0 0.0
        %470 = vmatpush1.msra.mxu0 0.0
        %471 = vmatprep.subr.mxu0 0.0
        %472 = vmatpush1.msra.mxu0 0.0
        %473 = vmatprep.subr.mxu0 0.0
        %474 = vmatpush1.msra.mxu0 0.0
        %475 = vmatprep.subr.mxu0 0.0
        %476 = vmatpush1.msra.mxu0 0.0
        %477 = vmatprep.subr.mxu0 0.0
        %478 = vmatpush1.msra.mxu0 0.0
        %479 = vmatprep.subr.mxu0 0.0
        %480 = vmatpush1.msra.mxu0 0.0
        %481 = vmatprep.subr.mxu0 0.0
        %482 = vmatpush1.msra.mxu0 0.0
        %483 = vmatprep.subr.mxu0 0.0
        %484 = vmatpush1.msra.mxu0 0.0
        %485 = vmatprep.subr.mxu0 0.0
        %486 = vmatpush1.msra.mxu0 0.0
        %487 = vmatprep.subr.mxu0 0.0
        %488 = vmatpush1.msra.mxu0 0.0
        %489 = vmatprep.subr.mxu0 0.0
        %490 = vmatpush1.msra.mxu0 0.0
        %491 = vmatprep.subr.mxu0 0.0
        %492 = vmatpush1.msra.mxu0 0.0
        %493 = vmatprep.subr.mxu0 0.0
        %494 = vmatpush1.msra.mxu0 0.0
        %495 = vmatprep.subr.mxu0 0.0
        %496 = vmatpush1.msra.mxu0 0.0
        %497 = vmatprep.subr.mxu0 0.0
        %498 = vmatpush1.msra.mxu0 %v288
        %499 = vmatprep.subr.mxu0 0.0
        %500 = vmatpush2.msra.mxu0 0.0
        %501 = vmatprep.subr.mxu0 0.0
        %502 = vmatpush2.msra.mxu0 0.0
        %503 = vmatprep.subr.mxu0 0.0
        %504 = vmatpush2.msra.mxu0 0.0
        %505 = vmatprep.subr.mxu0 0.0
        %506 = vmatpush2.msra.mxu0 0.0
        %507 = vmatprep.subr.mxu0 0.0
        %508 = vmatpush2.msra.mxu0 0.0
        %509 = vmatprep.subr.mxu0 0.0
        %510 = vmatpush2.msra.mxu0 0.0
        %511 = vmatprep.subr.mxu0 0.0
        %512 = vmatpush2.msra.mxu0 0.0
        %513 = vmatprep.subr.mxu0 0.0
        %514 = vmatpush2.msra.mxu0 0.0
        %515 = vmatprep.subr.mxu0 0.0
        %516 = vmatpush2.msra.mxu0 0.0
        %517 = vmatprep.subr.mxu0 0.0
        %518 = vmatpush2.msra.mxu0 0.0
        %519 = vmatprep.subr.mxu0 0.0
        %520 = vmatpush2.msra.mxu0 0.0
        %521 = vmatprep.subr.mxu0 0.0
        %522 = vmatpush2.msra.mxu0 0.0
        %523 = vmatprep.subr.mxu0 0.0
        %524 = vmatpush2.msra.mxu0 0.0
        %525 = vmatprep.subr.mxu0 0.0
        %526 = vmatpush2.msra.mxu0 0.0
        %527 = vmatprep.subr.mxu0 0.0
        %528 = vmatpush2.msra.mxu0 0.0
        %529 = vmatprep.subr.mxu0 0.0
        %530 = vmatpush2.msra.mxu0 0.0
        %531 = vmatprep.mubr.f32.mxu0 0.0
        %532 = vmatmul.mubr.f32.gmra.mxu0 %v465
        %v533 = vpop.f32.mrf.mxu0
        %v534 = vadd.f32 0.0, %v533
        %v535 = vpop.f32.mrf.mxu0
        %536 = vdwg.mxu0
        %v537 = vsel %vm451, %v295, 0
        %539 = vmatprep.subr.mxu0 0.0
        %540 = vmatpush1.msra.mxu0 0.0
        %541 = vmatprep.subr.mxu0 0.0
        %542 = vmatpush1.msra.mxu0 0.0
        %543 = vmatprep.subr.mxu0 0.0
        %544 = vmatpush1.msra.mxu0 0.0
        %545 = vmatprep.subr.mxu0 0.0
        %546 = vmatpush1.msra.mxu0 0.0
        %547 = vmatprep.subr.mxu0 0.0
        %548 = vmatpush1.msra.mxu0 0.0
        %549 = vmatprep.subr.mxu0 0.0
        %550 = vmatpush1.msra.mxu0 0.0
        %551 = vmatprep.subr.mxu0 0.0
        %552 = vmatpush1.msra.mxu0 0.0
        %553 = vmatprep.subr.mxu0 0.0
        %554 = vmatpush1.msra.mxu0 0.0
        %555 = vmatprep.subr.mxu0 0.0
        %556 = vmatpush1.msra.mxu0 0.0
        %557 = vmatprep.subr.mxu0 0.0
        %558 = vmatpush1.msra.mxu0 0.0
        %559 = vmatprep.subr.mxu0 0.0
        %560 = vmatpush1.msra.mxu0 0.0
        %561 = vmatprep.subr.mxu0 0.0
        %562 = vmatpush1.msra.mxu0 0.0
        %563 = vmatprep.subr.mxu0 0.0
        %564 = vmatpush1.msra.mxu0 0.0
        %565 = vmatprep.subr.mxu0 0.0
        %566 = vmatpush1.msra.mxu0 0.0
        %567 = vmatprep.subr.mxu0 0.0
        %568 = vmatpush1.msra.mxu0 0.0
        %569 = vmatprep.subr.mxu0 0.0
        %570 = vmatpush1.msra.mxu0 %v534
        %571 = vmatprep.subr.mxu0 0.0
        %572 = vmatpush2.msra.mxu0 0.0
        %573 = vmatprep.subr.mxu0 0.0
        %574 = vmatpush2.msra.mxu0 0.0
        %575 = vmatprep.subr.mxu0 0.0
        %576 = vmatpush2.msra.mxu0 0.0
        %577 = vmatprep.subr.mxu0 0.0
        %578 = vmatpush2.msra.mxu0 0.0
        %579 = vmatprep.subr.mxu0 0.0
        %580 = vmatpush2.msra.mxu0 0.0
        %581 = vmatprep.subr.mxu0 0.0
        %582 = vmatpush2.msra.mxu0 0.0
        %583 = vmatprep.subr.mxu0 0.0
        %584 = vmatpush2.msra.mxu0 0.0
        %585 = vmatprep.subr.mxu0 0.0
        %586 = vmatpush2.msra.mxu0 0.0
        %587 = vmatprep.subr.mxu0 0.0
        %588 = vmatpush2.msra.mxu0 0.0
        %589 = vmatprep.subr.mxu0 0.0
        %590 = vmatpush2.msra.mxu0 0.0
        %591 = vmatprep.subr.mxu0 0.0
        %592 = vmatpush2.msra.mxu0 0.0
        %593 = vmatprep.subr.mxu0 0.0
        %594 = vmatpush2.msra.mxu0 0.0
        %595 = vmatprep.subr.mxu0 0.0
        %596 = vmatpush2.msra.mxu0 0.0
        %597 = vmatprep.subr.mxu0 0.0
        %598 = vmatpush2.msra.mxu0 0.0
        %599 = vmatprep.subr.mxu0 0.0
        %600 = vmatpush2.msra.mxu0 0.0
        %601 = vmatprep.subr.mxu0 0.0
        %602 = vmatpush2.msra.mxu0 0.0
        %603 = vmatprep.mubr.f32.mxu0 0.0
        %604 = vmatmul.mubr.f32.gmra.mxu0 %v537
        %v605 = vpop.f32.mrf.mxu0
        %v606 = vadd.f32 0.0, %v605
        %v607 = vpop.f32.mrf.mxu0
        %608 = vdwg.mxu0
        %v609 = vand.u32 2147483647, %v606
        %vm610 = vcmask 27648
        %v611 = vsel %vm610, %v609, 0.0
        %612 = vadd.xlane.f32.xlu0 %v611
        %v613 = vpop.xlane.xlu0 %612
        %v614 = vrot.slane %v613, 4
        %v615 = vadd.f32 %v613, %v614
        %v616 = vrot.slane %v615, 2
        %v617 = vadd.f32 %v615, %v616
        %v618 = vrot.slane %v617, 1
        %v619 = vadd.f32 %v617, %v618
        %s620 = vtos %v619
        %s621 = smul.f32 %s620, 0.001953125
        %s622 = sadd.f32 %s463, %s621
        %vm623 = vcmask 31744
        %v625 = vsel %vm623, %v606, 0
        %vm627 = vcmask 1043456
        %v629 = vsel %vm627, %v288, 0
        %631 = vmatprep.subr.mxu0 0.0
        %632 = vmatpush1.msra.mxu0 0.0
        %633 = vmatprep.subr.mxu0 0.0
        %634 = vmatpush1.msra.mxu0 0.0
        %635 = vmatprep.subr.mxu0 0.0
        %636 = vmatpush1.msra.mxu0 0.0
        %637 = vmatprep.subr.mxu0 0.0
        %638 = vmatpush1.msra.mxu0 0.0
        %639 = vmatprep.subr.mxu0 0.0
        %640 = vmatpush1.msra.mxu0 0.0
        %641 = vmatprep.subr.mxu0 0.0
        %642 = vmatpush1.msra.mxu0 0.0
        %643 = vmatprep.subr.mxu0 0.0
        %644 = vmatpush1.msra.mxu0 0.0
        %645 = vmatprep.subr.mxu0 0.0
        %646 = vmatpush1.msra.mxu0 0.0
        %647 = vmatprep.subr.mxu0 0.0
        %648 = vmatpush1.msra.mxu0 0.0
        %649 = vmatprep.subr.mxu0 0.0
        %650 = vmatpush1.msra.mxu0 0.0
        %651 = vmatprep.subr.mxu0 0.0
        %652 = vmatpush1.msra.mxu0 0.0
        %653 = vmatprep.subr.mxu0 0.0
        %654 = vmatpush1.msra.mxu0 0.0
        %655 = vmatprep.subr.mxu0 0.0
        %656 = vmatpush1.msra.mxu0 0.0
        %657 = vmatprep.subr.mxu0 0.0
        %658 = vmatpush1.msra.mxu0 0.0
        %659 = vmatprep.subr.mxu0 0.0
        %660 = vmatpush1.msra.mxu0 0.0
        %661 = vmatprep.subr.mxu0 0.0
        %662 = vmatpush1.msra.mxu0 %v629
        %663 = vmatprep.subr.mxu0 0.0
        %664 = vmatpush2.msra.mxu0 0.0
        %665 = vmatprep.subr.mxu0 0.0
        %666 = vmatpush2.msra.mxu0 0.0
        %667 = vmatprep.subr.mxu0 0.0
        %668 = vmatpush2.msra.mxu0 0.0
        %669 = vmatprep.subr.mxu0 0.0
        %670 = vmatpush2.msra.mxu0 0.0
        %671 = vmatprep.subr.mxu0 0.0
        %672 = vmatpush2.msra.mxu0 0.0
        %673 = vmatprep.subr.mxu0 0.0
        %674 = vmatpush2.msra.mxu0 0.0
        %675 = vmatprep.subr.mxu0 0.0
        %676 = vmatpush2.msra.mxu0 0.0
        %677 = vmatprep.subr.mxu0 0.0
        %678 = vmatpush2.msra.mxu0 0.0
        %679 = vmatprep.subr.mxu0 0.0
        %680 = vmatpush2.msra.mxu0 0.0
        %681 = vmatprep.subr.mxu0 0.0
        %682 = vmatpush2.msra.mxu0 0.0
        %683 = vmatprep.subr.mxu0 0.0
        %684 = vmatpush2.msra.mxu0 0.0
        %685 = vmatprep.subr.mxu0 0.0
        %686 = vmatpush2.msra.mxu0 0.0
        %687 = vmatprep.subr.mxu0 0.0
        %688 = vmatpush2.msra.mxu0 0.0
        %689 = vmatprep.subr.mxu0 0.0
        %690 = vmatpush2.msra.mxu0 0.0
        %691 = vmatprep.subr.mxu0 0.0
        %692 = vmatpush2.msra.mxu0 0.0
        %693 = vmatprep.subr.mxu0 0.0
        %694 = vmatpush2.msra.mxu0 0.0
        %695 = vmatprep.mubr.f32.mxu0 0.0
        %696 = vmatmul.mubr.f32.gmra.mxu0 %v625
        %v697 = vpop.f32.mrf.mxu0
        %v698 = vadd.f32 0.0, %v697
        %v699 = vpop.f32.mrf.mxu0
        %700 = vdwg.mxu0
        %v701 = vsel %vm623, %v295, 0
        %v704 = vsel %vm627, %v698, 0
        %706 = vmatprep.subr.mxu0 0.0
        %707 = vmatpush1.msra.mxu0 0.0
        %708 = vmatprep.subr.mxu0 0.0
        %709 = vmatpush1.msra.mxu0 0.0
        %710 = vmatprep.subr.mxu0 0.0
        %711 = vmatpush1.msra.mxu0 0.0
        %712 = vmatprep.subr.mxu0 0.0
        %713 = vmatpush1.msra.mxu0 0.0
        %714 = vmatprep.subr.mxu0 0.0
        %715 = vmatpush1.msra.mxu0 0.0
        %716 = vmatprep.subr.mxu0 0.0
        %717 = vmatpush1.msra.mxu0 0.0
        %718 = vmatprep.subr.mxu0 0.0
        %719 = vmatpush1.msra.mxu0 0.0
        %720 = vmatprep.subr.mxu0 0.0
        %721 = vmatpush1.msra.mxu0 0.0
        %722 = vmatprep.subr.mxu0 0.0
        %723 = vmatpush1.msra.mxu0 0.0
        %724 = vmatprep.subr.mxu0 0.0
        %725 = vmatpush1.msra.mxu0 0.0
        %726 = vmatprep.subr.mxu0 0.0
        %727 = vmatpush1.msra.mxu0 0.0
        %728 = vmatprep.subr.mxu0 0.0
        %729 = vmatpush1.msra.mxu0 0.0
        %730 = vmatprep.subr.mxu0 0.0
        %731 = vmatpush1.msra.mxu0 0.0
        %732 = vmatprep.subr.mxu0 0.0
        %733 = vmatpush1.msra.mxu0 0.0
        %734 = vmatprep.subr.mxu0 0.0
        %735 = vmatpush1.msra.mxu0 0.0
        %736 = vmatprep.subr.mxu0 0.0
        %737 = vmatpush1.msra.mxu0 %v704
        %738 = vmatprep.subr.mxu0 0.0
        %739 = vmatpush2.msra.mxu0 0.0
        %740 = vmatprep.subr.mxu0 0.0
        %741 = vmatpush2.msra.mxu0 0.0
        %742 = vmatprep.subr.mxu0 0.0
        %743 = vmatpush2.msra.mxu0 0.0
        %744 = vmatprep.subr.mxu0 0.0
        %745 = vmatpush2.msra.mxu0 0.0
        %746 = vmatprep.subr.mxu0 0.0
        %747 = vmatpush2.msra.mxu0 0.0
        %748 = vmatprep.subr.mxu0 0.0
        %749 = vmatpush2.msra.mxu0 0.0
        %750 = vmatprep.subr.mxu0 0.0
        %751 = vmatpush2.msra.mxu0 0.0
        %752 = vmatprep.subr.mxu0 0.0
        %753 = vmatpush2.msra.mxu0 0.0
        %754 = vmatprep.subr.mxu0 0.0
        %755 = vmatpush2.msra.mxu0 0.0
        %756 = vmatprep.subr.mxu0 0.0
        %757 = vmatpush2.msra.mxu0 0.0
        %758 = vmatprep.subr.mxu0 0.0
        %759 = vmatpush2.msra.mxu0 0.0
        %760 = vmatprep.subr.mxu0 0.0
        %761 = vmatpush2.msra.mxu0 0.0
        %762 = vmatprep.subr.mxu0 0.0
        %763 = vmatpush2.msra.mxu0 0.0
        %764 = vmatprep.subr.mxu0 0.0
        %765 = vmatpush2.msra.mxu0 0.0
        %766 = vmatprep.subr.mxu0 0.0
        %767 = vmatpush2.msra.mxu0 0.0
        %768 = vmatprep.subr.mxu0 0.0
        %769 = vmatpush2.msra.mxu0 0.0
        %770 = vmatprep.mubr.f32.mxu0 0.0
        %771 = vmatmul.mubr.f32.gmra.mxu0 %v701
        %v772 = vpop.f32.mrf.mxu0
        %v773 = vadd.f32 0.0, %v772
        %v774 = vpop.f32.mrf.mxu0
        %775 = vdwg.mxu0
        %v776 = vand.u32 2147483647, %v773
        %vm777 = vcmask 9216
        %v778 = vsel %vm777, %v776, 0.0
        %779 = vadd.xlane.f32.xlu0 %v778
        %v780 = vpop.xlane.xlu0 %779
        %v781 = vrot.slane %v780, 4
        %v782 = vadd.f32 %v780, %v781
        %v783 = vrot.slane %v782, 2
        %v784 = vadd.f32 %v782, %v783
        %v785 = vrot.slane %v784, 1
        %v786 = vadd.f32 %v784, %v785
        %s787 = vtos %v786
        %s788 = smul.f32 %s787, 0.00390625
        %s789 = sadd.f32 %s622, %s788
        %vm790 = vcmask 15360
        %v792 = vsel %vm790, %v773, 0
        %vm794 = vcmask 1041408
        %v795 = vsel %vm794, %v288, 0
        %797 = vmatprep.subr.mxu0 0.0
        %798 = vmatpush1.msra.mxu0 0.0
        %799 = vmatprep.subr.mxu0 0.0
        %800 = vmatpush1.msra.mxu0 0.0
        %801 = vmatprep.subr.mxu0 0.0
        %802 = vmatpush1.msra.mxu0 0.0
        %803 = vmatprep.subr.mxu0 0.0
        %804 = vmatpush1.msra.mxu0 0.0
        %805 = vmatprep.subr.mxu0 0.0
        %806 = vmatpush1.msra.mxu0 0.0
        %807 = vmatprep.subr.mxu0 0.0
        %808 = vmatpush1.msra.mxu0 0.0
        %809 = vmatprep.subr.mxu0 0.0
        %810 = vmatpush1.msra.mxu0 0.0
        %811 = vmatprep.subr.mxu0 0.0
        %812 = vmatpush1.msra.mxu0 0.0
        %813 = vmatprep.subr.mxu0 0.0
        %814 = vmatpush1.msra.mxu0 0.0
        %815 = vmatprep.subr.mxu0 0.0
        %816 = vmatpush1.msra.mxu0 0.0
        %817 = vmatprep.subr.mxu0 0.0
        %818 = vmatpush1.msra.mxu0 0.0
        %819 = vmatprep.subr.mxu0 0.0
        %820 = vmatpush1.msra.mxu0 0.0
        %821 = vmatprep.subr.mxu0 0.0
        %822 = vmatpush1.msra.mxu0 0.0
        %823 = vmatprep.subr.mxu0 0.0
        %824 = vmatpush1.msra.mxu0 0.0
        %825 = vmatprep.subr.mxu0 0.0
        %826 = vmatpush1.msra.mxu0 0.0
        %827 = vmatprep.subr.mxu0 0.0
        %828 = vmatpush1.msra.mxu0 %v795
        %829 = vmatprep.subr.mxu0 0.0
        %830 = vmatpush2.msra.mxu0 0.0
        %831 = vmatprep.subr.mxu0 0.0
        %832 = vmatpush2.msra.mxu0 0.0
        %833 = vmatprep.subr.mxu0 0.0
        %834 = vmatpush2.msra.mxu0 0.0
        %835 = vmatprep.subr.mxu0 0.0
        %836 = vmatpush2.msra.mxu0 0.0
        %837 = vmatprep.subr.mxu0 0.0
        %838 = vmatpush2.msra.mxu0 0.0
        %839 = vmatprep.subr.mxu0 0.0
        %840 = vmatpush2.msra.mxu0 0.0
        %841 = vmatprep.subr.mxu0 0.0
        %842 = vmatpush2.msra.mxu0 0.0
        %843 = vmatprep.subr.mxu0 0.0
        %844 = vmatpush2.msra.mxu0 0.0
        %845 = vmatprep.subr.mxu0 0.0
        %846 = vmatpush2.msra.mxu0 0.0
        %847 = vmatprep.subr.mxu0 0.0
        %848 = vmatpush2.msra.mxu0 0.0
        %849 = vmatprep.subr.mxu0 0.0
        %850 = vmatpush2.msra.mxu0 0.0
        %851 = vmatprep.subr.mxu0 0.0
        %852 = vmatpush2.msra.mxu0 0.0
        %853 = vmatprep.subr.mxu0 0.0
        %854 = vmatpush2.msra.mxu0 0.0
        %855 = vmatprep.subr.mxu0 0.0
        %856 = vmatpush2.msra.mxu0 0.0
        %857 = vmatprep.subr.mxu0 0.0
        %858 = vmatpush2.msra.mxu0 0.0
        %859 = vmatprep.subr.mxu0 0.0
        %860 = vmatpush2.msra.mxu0 0.0
        %861 = vmatprep.mubr.f32.mxu0 0.0
        %862 = vmatmul.mubr.f32.gmra.mxu0 %v792
        %v863 = vpop.f32.mrf.mxu0
        %v864 = vadd.f32 0.0, %v863
        %v865 = vpop.f32.mrf.mxu0
        %866 = vdwg.mxu0
        %v867 = vsel %vm790, %v295, 0
        %v870 = vsel %vm794, %v864, 0
        %872 = vmatprep.subr.mxu0 0.0
        %873 = vmatpush1.msra.mxu0 0.0
        %874 = vmatprep.subr.mxu0 0.0
        %875 = vmatpush1.msra.mxu0 0.0
        %876 = vmatprep.subr.mxu0 0.0
        %877 = vmatpush1.msra.mxu0 0.0
        %878 = vmatprep.subr.mxu0 0.0
        %879 = vmatpush1.msra.mxu0 0.0
        %880 = vmatprep.subr.mxu0 0.0
        %881 = vmatpush1.msra.mxu0 0.0
        %882 = vmatprep.subr.mxu0 0.0
        %883 = vmatpush1.msra.mxu0 0.0
        %884 = vmatprep.subr.mxu0 0.0
        %885 = vmatpush1.msra.mxu0 0.0
        %886 = vmatprep.subr.mxu0 0.0
        %887 = vmatpush1.msra.mxu0 0.0
        %888 = vmatprep.subr.mxu0 0.0
        %889 = vmatpush1.msra.mxu0 0.0
        %890 = vmatprep.subr.mxu0 0.0
        %891 = vmatpush1.msra.mxu0 0.0
        %892 = vmatprep.subr.mxu0 0.0
        %893 = vmatpush1.msra.mxu0 0.0
        %894 = vmatprep.subr.mxu0 0.0
        %895 = vmatpush1.msra.mxu0 0.0
        %896 = vmatprep.subr.mxu0 0.0
        %897 = vmatpush1.msra.mxu0 0.0
        %898 = vmatprep.subr.mxu0 0.0
        %899 = vmatpush1.msra.mxu0 0.0
        %900 = vmatprep.subr.mxu0 0.0
        %901 = vmatpush1.msra.mxu0 0.0
        %902 = vmatprep.subr.mxu0 0.0
        %903 = vmatpush1.msra.mxu0 %v870
        %904 = vmatprep.subr.mxu0 0.0
        %905 = vmatpush2.msra.mxu0 0.0
        %906 = vmatprep.subr.mxu0 0.0
        %907 = vmatpush2.msra.mxu0 0.0
        %908 = vmatprep.subr.mxu0 0.0
        %909 = vmatpush2.msra.mxu0 0.0
        %910 = vmatprep.subr.mxu0 0.0
        %911 = vmatpush2.msra.mxu0 0.0
        %912 = vmatprep.subr.mxu0 0.0
        %913 = vmatpush2.msra.mxu0 0.0
        %914 = vmatprep.subr.mxu0 0.0
        %915 = vmatpush2.msra.mxu0 0.0
        %916 = vmatprep.subr.mxu0 0.0
        %917 = vmatpush2.msra.mxu0 0.0
        %918 = vmatprep.subr.mxu0 0.0
        %919 = vmatpush2.msra.mxu0 0.0
        %920 = vmatprep.subr.mxu0 0.0
        %921 = vmatpush2.msra.mxu0 0.0
        %922 = vmatprep.subr.mxu0 0.0
        %923 = vmatpush2.msra.mxu0 0.0
        %924 = vmatprep.subr.mxu0 0.0
        %925 = vmatpush2.msra.mxu0 0.0
        %926 = vmatprep.subr.mxu0 0.0
        %927 = vmatpush2.msra.mxu0 0.0
        %928 = vmatprep.subr.mxu0 0.0
        %929 = vmatpush2.msra.mxu0 0.0
        %930 = vmatprep.subr.mxu0 0.0
        %931 = vmatpush2.msra.mxu0 0.0
        %932 = vmatprep.subr.mxu0 0.0
        %933 = vmatpush2.msra.mxu0 0.0
        %934 = vmatprep.subr.mxu0 0.0
        %935 = vmatpush2.msra.mxu0 0.0
        %936 = vmatprep.mubr.f32.mxu0 0.0
        %937 = vmatmul.mubr.f32.gmra.mxu0 %v867
        %v938 = vpop.f32.mrf.mxu0
        %v939 = vadd.f32 0.0, %v938
        %v940 = vpop.f32.mrf.mxu0
        %941 = vdwg.mxu0
        %v942 = vand.u32 2147483647, %v939
        %v943 = vadd.f32 %v942, 0.0
        %s944 = vtos %v943
        %s945 = smul.f32 %s944, 0.015625
        %s946 = sadd.f32 %s789, %s945
        %v947 = vstv %s946
        %vm948 = vcmask 0
        %949 = vst.msk [vmem:[%s248] sm:$0x1] %vm948, %v947
        %s950 = sadd.s32 %s24, %s25
        %s951 = smul.u32 %s950, 4
        %s952 = sadd.s32 %s951, %s26
        %p953 = scmp.lt.s32.totalorder %s952, 7
        %s954 = scalar_select %p953, %s952, 7
        %s955 = scalar_lea.vmem %s2, %s954
        // Predicated region
        $region37: #{tpu_custom_call.1} parent=27 // pred_check
          %p956 = pneg %p122
        $region38: #{tpu_custom_call.1} parent=27 // pred_check_branch
          %958 = sbr.rel (%p956) target = $region40
        $region39: #{tpu_custom_call.1} parent=27 // pred_region
          %s959 = sadd.s32 %s24, %s25
          %s960 = smul.u32 %s959, 4
          %s961 = sadd.s32 %s960, %s26
        $region40: #{tpu_custom_call.1} parent=27 // pred_fallthru
          _
      $region28: #{tpu_custom_call.1} parent=5 // pred_fallthru
        _
      %p962 = scmp.le.s32.totalorder 2, %s14
      // Predicated region
      $region41: #{tpu_custom_call.1} parent=5 // pred_check
        %p963 = pneg %p962
      $region42: #{tpu_custom_call.1} parent=5 // pred_check_branch
        %965 = sbr.rel (%p963) target = $region44
      $region43: #{tpu_custom_call.1} parent=5 // pred_region
        %s966 = ssub.s32 %s14, 2
        // Predicated region
        $region45: #{tpu_custom_call.1} parent=43 // pred_check
          %p967 = pneg %p128
        $region46: #{tpu_custom_call.1} parent=43 // pred_check_branch
          %969 = sbr.rel (%p967) target = $region48
        $region47: #{tpu_custom_call.1} parent=43 // pred_region
          %s970 = sadd.s32 %s27, %s28
          %s971 = smul.u32 %s970, 4
          %s972 = sadd.s32 %s971, %s29
          %p973 = scmp.lt.s32.totalorder %s972, 7
          %s974 = scalar_select %p973, %s972, 7
          %s975 = scalar_lea.vmem %s2, %s974
        $region48: #{tpu_custom_call.1} parent=43 // pred_fallthru
          _
      $region44: #{tpu_custom_call.1} parent=5 // pred_fallthru
        _
    $region6: #{tpu_custom_call.1} parent=1 // loop_footer
      %s18 = sadd.s32 1, %s14
    $region7: #{tpu_custom_call.1} parent=1 // loop_footer_branch
      %13 = sbr.rel target = $region3
    $region8: #{tpu_custom_call.1} parent=1 // loop_exit
      _
    %976 = vsyncpa [#allocation3], 1
    %s977 = scalar_lea.sflag [#allocation3], 1
    %978 = vsyncpa %s977, 1
    %979 = vsyncpa [#allocation5], 1
    %s980 = scalar_lea.sflag [#allocation5], 1
    %981 = vsyncpa %s980, 1

</llo_original>
